<compile_context>
chip_gen: v7x
topology: tpu7x:2x2x1
jax: 0.10.0
libtpu: 0.0.40
codegen_flags: <defaults>
</compile_context>

<pallas_src>
import jax
import jax.numpy as jnp
from jax.experimental import pallas as pl
from jax.experimental.pallas import tpu as pltpu

VOCAB = 100
LANE = 128


def _round_up(x, m):
    return (x + m - 1) // m * m


def _atom_encoder_kernel(idxT_ref, f4_ref, out_ref):
    # idxT_ref : (pack, TR)            int32   token ids, lane-dense (TR tokens*groups)
    # f4_ref   : (pack*VPAD, W)        float32 block-diagonal fused table
    # out_ref  : (TR, W)               float32 packed output rows (pack tokens / row)
    pack, tr = idxT_ref.shape
    kdim, _ = f4_ref.shape
    vpad = kdim // pack

    idxT = idxT_ref[...]                                             # (pack, TR)
    # Value index along sublanes; token index runs along lanes (dense compare).
    v_iota = jax.lax.broadcasted_iota(jnp.int32, (vpad, tr), 0)      # (VPAD, TR)

    # Banded, transposed one-hot: band_g[v, r] = (idx[r*pack+g] == v).
    bands = []
    for g in range(pack):                                            # static unroll (pack <= 128)
        bands.append((v_iota == idxT[g:g + 1, :]).astype(jnp.float32))
    ohT = jnp.concatenate(bands, axis=0) if pack > 1 else bands[0]   # (pack*VPAD, TR)

    # Lane->sublane spread happens here, as one tile-aligned f32 transpose (XLU).
    oh = jnp.transpose(ohT)                                          # (TR, pack*VPAD)

    # Single MXU matmul: gather + linear + bias all at once (exact in f32:
    # each row multiplies a single 1.0 against one table row).
    out_ref[...] = jnp.dot(oh, f4_ref[...],
                           preferred_element_type=jnp.float32).astype(out_ref.dtype)


def atom_encoder(atom_types, embed_table, w, b, *, tm=4096):
    """atom_types: [B, N] int; embed_table: [V, H]; w: [H, H] (PyTorch (out,in)); b: [H]."""
    B, N = atom_types.shape
    V, H = embed_table.shape
    M = B * N

    # --- algebraic fusion (one-time, tiny): F = E @ W^T + b, full f32 precision
    fused = jnp.dot(embed_table.astype(jnp.float32), w.astype(jnp.float32).T,
                    precision=jax.lax.Precision.HIGHEST) + b.astype(jnp.float32)[None, :]

    vpad = _round_up(V, LANE)                      # pad contraction dim per band to 128
    pack = LANE // H if (H <= LANE and LANE % H == 0) else 1
    w_out = pack * H if (pack * H) % LANE == 0 else _round_up(H, LANE)

    # Block-diagonal fused table: F4[g*VPAD+v, g*H:(g+1)*H] = F[v]
    f4 = jnp.zeros((pack * vpad, w_out), jnp.float32)
    for g in range(pack):
        f4 = f4.at[g * vpad: g * vpad + V, g * H: (g + 1) * H].set(fused)

    # --- token tiling: tm tokens per grid step, TR = tm/pack output rows/step
    unit = pack * LANE                              # keeps TR a multiple of 128
    tm_eff = min(_round_up(tm, unit), _round_up(M, unit))
    m_pad = _round_up(M, tm_eff)
    tr = tm_eff // pack
    rows = m_pad // pack

    idx_flat = jnp.zeros((m_pad,), jnp.int32).at[:M].set(
        atom_types.reshape(M).astype(jnp.int32))
    idxT = idx_flat.reshape(rows, pack).T           # (pack, rows): lane-dense DMA layout

    grid = (m_pad // tm_eff,)
    flops = int(2 * rows * (pack * vpad) * w_out)
    bytes_accessed = int(4 * m_pad + 4 * pack * vpad * w_out + 4 * rows * w_out)

    out = pl.pallas_call(
        _atom_encoder_kernel,
        out_shape=jax.ShapeDtypeStruct((rows, w_out), jnp.float32),
        grid=grid,
        in_specs=[
            pl.BlockSpec((pack, tr), lambda i: (0, i)),           # idx tile (pipelined, dense)
            pl.BlockSpec((pack * vpad, w_out), lambda i: (0, 0)), # fused table (fetched once)
        ],
        out_specs=pl.BlockSpec((tr, w_out), lambda i: (i, 0)),    # packed, lane-dense output
        compiler_params=pltpu.CompilerParams(
            dimension_semantics=("parallel",),                    # 2-TC sharding on v7x
            vmem_limit_bytes=32 * 1024 * 1024),                   # v5e default is only 16 MiB
        cost_estimate=pl.CostEstimate(flops=flops, transcendentals=0,
                                      bytes_accessed=bytes_accessed),
    )(idxT, f4)

    if pack > 1:
        res = out.reshape(m_pad, H)[:M]            # free row-major view + row slice
    else:
        res = out[:M, :H]
    return res.reshape(B, N, H)


if __name__ == "__main__":
    B, N, H = 2, 8, 32

    key = jax.random.PRNGKey(0)
    k_idx, k_emb, k_w, k_b = jax.random.split(key, 4)

    atom_types = jax.random.randint(k_idx, (B, N), 0, VOCAB, dtype=jnp.int32)
    embed_table = jax.random.normal(k_emb, (VOCAB, H), dtype=jnp.float32)
    w = jax.random.normal(k_w, (H, H), dtype=jnp.float32) * (1.0 / jnp.sqrt(H))
    b = jax.random.normal(k_b, (H,), dtype=jnp.float32) * 0.01

    out = atom_encoder(atom_types, embed_table, w, b)
    out = jax.block_until_ready(out)

    # Reference in plain JAX (full precision) to sanity-check semantics.
    ref = jnp.dot(jnp.take(embed_table, atom_types, axis=0), w.T,
                  precision=jax.lax.Precision.HIGHEST) + b
    assert out.shape == (B, N, H)
    assert jnp.allclose(out, ref, atol=1e-5, rtol=1e-5)

    print("KERNEL_OK")
</pallas_src>

<mosaic_0001>
module attributes {stable_mosaic.version = 11 : i64} {
  func.func @_atom_encoder_kernel(%arg0: i32, %arg1: memref<4x128xi32, #tpu.memory_space<vmem>>, %arg2: memref<512x128xf32, #tpu.memory_space<vmem>>, %arg3: memref<128x128xf32, #tpu.memory_space<vmem>>) attributes {dimension_semantics = [#tpu.dimension_semantics<parallel>], iteration_bounds = array<i64: 1>, scalar_prefetch = 0 : i64, scratch_operands = 0 : i64, tpu.core_type = #tpu.core_type<tc>, window_params = [{transform_indices = @transform_0, window_bounds = array<i64: 4, 128>}, {pipeline_mode = #tpu.pipeline_mode<synchronous>, transform_indices = @transform_1, window_bounds = array<i64: 512, 128>}, {transform_indices = @transform_2, window_bounds = array<i64: 128, 128>}]} {
    %c0 = arith.constant 0 : index
    %c0_0 = arith.constant 0 : index
    %0 = vector.load %arg1[%c0, %c0_0] : memref<4x128xi32, #tpu.memory_space<vmem>>, vector<4x128xi32>
    %1 = tpu.iota {dimensions = array<i32: 0>} : vector<128x128xi32>
    %2 = vector.extract_strided_slice %0 {offsets = [0, 0], sizes = [1, 128], strides = [1, 1]} : vector<4x128xi32> to vector<1x128xi32>
    %3 = vector.broadcast %2 : vector<1x128xi32> to vector<128x128xi32>
    %4 = arith.cmpi eq, %1, %3 : vector<128x128xi32>
    %5 = arith.extui %4 : vector<128x128xi1> to vector<128x128xi32>
    %6 = arith.sitofp %5 : vector<128x128xi32> to vector<128x128xf32>
    %7 = vector.extract_strided_slice %0 {offsets = [1, 0], sizes = [1, 128], strides = [1, 1]} : vector<4x128xi32> to vector<1x128xi32>
    %8 = vector.broadcast %7 : vector<1x128xi32> to vector<128x128xi32>
    %9 = arith.cmpi eq, %1, %8 : vector<128x128xi32>
    %10 = arith.extui %9 : vector<128x128xi1> to vector<128x128xi32>
    %11 = arith.sitofp %10 : vector<128x128xi32> to vector<128x128xf32>
    %12 = vector.extract_strided_slice %0 {offsets = [2, 0], sizes = [1, 128], strides = [1, 1]} : vector<4x128xi32> to vector<1x128xi32>
    %13 = vector.broadcast %12 : vector<1x128xi32> to vector<128x128xi32>
    %14 = arith.cmpi eq, %1, %13 : vector<128x128xi32>
    %15 = arith.extui %14 : vector<128x128xi1> to vector<128x128xi32>
    %16 = arith.sitofp %15 : vector<128x128xi32> to vector<128x128xf32>
    %17 = vector.extract_strided_slice %0 {offsets = [3, 0], sizes = [1, 128], strides = [1, 1]} : vector<4x128xi32> to vector<1x128xi32>
    %18 = vector.broadcast %17 : vector<1x128xi32> to vector<128x128xi32>
    %19 = arith.cmpi eq, %1, %18 : vector<128x128xi32>
    %20 = arith.extui %19 : vector<128x128xi1> to vector<128x128xi32>
    %21 = arith.sitofp %20 : vector<128x128xi32> to vector<128x128xf32>
    %22 = tpu.concatenate %6, %11, %16, %21 in 0 : vector<128x128xf32>, vector<128x128xf32>, vector<128x128xf32>, vector<128x128xf32> -> vector<512x128xf32>
    %23 = tpu.transpose %22, [1, 0] : vector<512x128xf32> -> vector<128x512xf32>
    %c0_1 = arith.constant 0 : index
    %c0_2 = arith.constant 0 : index
    %24 = vector.load %arg2[%c0_1, %c0_2] : memref<512x128xf32, #tpu.memory_space<vmem>>, vector<512x128xf32>
    %cst = arith.constant dense<0.000000e+00> : vector<128x128xf32>
    %25 = tpu.matmul %23, %24, %cst {dimension_numbers = #tpu.dot_dimension_numbers<[1], [0], [0], [1], [0, 0, 1, 1], [], []>} : vector<128x512xf32>, vector<512x128xf32>, vector<128x128xf32> -> vector<128x128xf32>
    %c0_3 = arith.constant 0 : index
    %c0_4 = arith.constant 0 : index
    %26 = vector.load %arg3[%c0_3, %c0_4] : memref<128x128xf32, #tpu.memory_space<vmem>>, vector<128x128xf32>
    tpu.vector_store %arg3[%c0_3, %c0_4], %25 {strides = array<i32>} : memref<128x128xf32, #tpu.memory_space<vmem>>, vector<128x128xf32>,
    return
  }
  func.func @transform_0(%arg0: i32) -> (i32, i32) {
    %c0_i32 = arith.constant 0 : i32
    %c0_i32_0 = arith.constant 0 : i32
    return %c0_i32, %arg0 : i32, i32
  }
  func.func @transform_1(%arg0: i32) -> (i32, i32) {
    %c0_i32 = arith.constant 0 : i32
    %c0_i32_0 = arith.constant 0 : i32
    %c0_i32_1 = arith.constant 0 : i32
    return %c0_i32, %c0_i32_0 : i32, i32
  }
  func.func @transform_2(%arg0: i32) -> (i32, i32) {
    %c0_i32 = arith.constant 0 : i32
    %c0_i32_0 = arith.constant 0 : i32
    return %arg0, %c0_i32 : i32, i32
  }
}

</mosaic_0001>

<llo_original>
// kernel: tpu_custom_call.1
$region0: #{tpu_custom_call.1}
  #allocation0 [shape = 'u32[]', space=smem, size = 0x4, offset = 0x4, fixed_abs, tag = 'smem constant byte address 0x4 - core index']
  #allocation1 [shape = 'u32[144,128]{1,0:T(1,128)}', space=vmem, size = 0x12000, scoped, tag = 'internal scratch']
  %s0 = inlined_call_operand.hbm [shape: s32[4,128], index: 0, kind: input, shape index: {}]
  %s1 = inlined_call_operand.hbm [shape: f32[512,128], index: 1, kind: input, shape index: {}]
  %s2 = inlined_call_operand.hbm [shape: f32[128,128], index: 2, kind: output, shape index: {}]
  %s3 = sld [smem:[#allocation0]]
  $region26: #{tpu_custom_call.1} parent=0
    _
  %s5 = ssub.s32 1, %s3
  %s6 = scalar_select 0, %s5, %s3
  $region1: #{tpu_custom_call.1} parent=0
    #allocation2 [shape = 'u8[2048]{0}', space=vmem, size = 0x800, scoped, tag = 'input window, operand 0, single buffered']
    #allocation3 [shape = 's32[1]{0}', space=sflag, size = 0x4, scoped, tag = 'scoped memory for tpu_custom_call.1']
    #allocation4 [shape = 's32[1]{0}', space=sflag, size = 0x4, scoped, tag = 'scoped memory for tpu_custom_call.1']
    #allocation5 [shape = 'u8[262144]{0}', space=vmem, size = 0x40000, scoped, tag = 'input window, operand 1, single buffered']
    #allocation6 [shape = 's32[1]{0}', space=sflag, size = 0x4, scoped, tag = 'scoped memory for tpu_custom_call.1']
    #allocation7 [shape = 'u8[65536]{0}', space=vmem, size = 0x10000, scoped, tag = 'output window, operand 0, single buffered']
    %7 = vsyncpa [#allocation3], 0
    %8 = vsyncpa [#allocation6], 0
    %9 = vsyncpa [#allocation4], 0
    // Predicated region
    $region2: #{tpu_custom_call.1} parent=1 // pred_check
      _
    $region3: #{tpu_custom_call.1} parent=1 // pred_check_branch
      %11 = sbr.rel (0) target = $region5
    $region4: #{tpu_custom_call.1} parent=1 // pred_region
      %s13 = ssub.s32 64, 64
      %14 = vsyncadd [#allocation3], %s13
      %s16 = sshll.u32 [#allocation2], 4
      %s17 = int_to_ptr.vmem [resolvable:$true] %s16
      %19 = dma.hbm_to_vmem [thread:$0]  %s0, 64, %s17, [#allocation3]
    $region5: #{tpu_custom_call.1} parent=1 // pred_fallthru
      _
    // Predicated region
    $region6: #{tpu_custom_call.1} parent=1 // pred_check
      _
    $region7: #{tpu_custom_call.1} parent=1 // pred_check_branch
      %21 = sbr.rel (0) target = $region9
    $region8: #{tpu_custom_call.1} parent=1 // pred_region
      %s23 = ssub.s32 8192, 8192
      %24 = vsyncadd [#allocation6], %s23
      %s25 = sshll.u32 [#allocation5], 4
      %s26 = int_to_ptr.vmem [resolvable:$true] %s25
      %31 = dma.hbm_to_vmem [thread:$0]  %s1, 8192, %s26, [#allocation6], 128, 128, 8
    $region9: #{tpu_custom_call.1} parent=1 // pred_fallthru
      _
    // Predicated region
    $region10: #{tpu_custom_call.1} parent=1 // pred_check
      _
    $region11: #{tpu_custom_call.1} parent=1 // pred_check_branch
      %33 = sbr.rel (0) target = $region13
    $region12: #{tpu_custom_call.1} parent=1 // pred_region
      %34 = dma.done [#allocation3], 64
    $region13: #{tpu_custom_call.1} parent=1 // pred_fallthru
      _
    // Predicated region
    $region14: #{tpu_custom_call.1} parent=1 // pred_check
      _
    $region15: #{tpu_custom_call.1} parent=1 // pred_check_branch
      %36 = sbr.rel (0) target = $region17
    $region16: #{tpu_custom_call.1} parent=1 // pred_region
      %37 = dma.done [#allocation6], 8192
    $region17: #{tpu_custom_call.1} parent=1 // pred_fallthru
      _
    %v38 = vld [vmem:[#allocation2] sm:$0xf]
    %v39 = vlaneseq
    %v40 = vshrl.u32 %v39, 7
    %v41 = vadd.s32 %v40, 8
    %v42 = vadd.s32 %v40, 16
    %v43 = vadd.s32 %v40, 24
    %v44 = vadd.s32 %v40, 32
    %v45 = vadd.s32 %v40, 40
    %v46 = vadd.s32 %v40, 48
    %v47 = vadd.s32 %v40, 56
    %v48 = vadd.s32 %v40, 64
    %v49 = vadd.s32 %v40, 72
    %v50 = vadd.s32 %v40, 80
    %v51 = vadd.s32 %v40, 88
    %v52 = vadd.s32 %v40, 96
    %v53 = vadd.s32 %v40, 104
    %v54 = vadd.s32 %v40, 112
    %v55 = vadd.s32 %v40, 120
    %v56 = vlaneseq
    %v57 = vshrl.u32 %v56, 7
    %v58 = vsub.s32 0, %v57
    %v59 = vrot.slane %v38, %v58
    %vm60 = vcmp.eq.s32.totalorder %v40, %v59
    %vm61 = vcmp.eq.s32.totalorder %v41, %v59
    %vm62 = vcmp.eq.s32.totalorder %v42, %v59
    %vm63 = vcmp.eq.s32.totalorder %v43, %v59
    %vm64 = vcmp.eq.s32.totalorder %v44, %v59
    %vm65 = vcmp.eq.s32.totalorder %v45, %v59
    %vm66 = vcmp.eq.s32.totalorder %v46, %v59
    %vm67 = vcmp.eq.s32.totalorder %v47, %v59
    %vm68 = vcmp.eq.s32.totalorder %v48, %v59
    %vm69 = vcmp.eq.s32.totalorder %v49, %v59
    %vm70 = vcmp.eq.s32.totalorder %v50, %v59
    %vm71 = vcmp.eq.s32.totalorder %v51, %v59
    %vm72 = vcmp.eq.s32.totalorder %v52, %v59
    %vm73 = vcmp.eq.s32.totalorder %v53, %v59
    %vm74 = vcmp.eq.s32.totalorder %v54, %v59
    %vm75 = vcmp.eq.s32.totalorder %v55, %v59
    %v76 = vsel %vm60, 1, 0
    %v77 = vsel %vm61, 1, 0
    %v78 = vsel %vm62, 1, 0
    %v79 = vsel %vm63, 1, 0
    %v80 = vsel %vm64, 1, 0
    %v81 = vsel %vm65, 1, 0
    %v82 = vsel %vm66, 1, 0
    %v83 = vsel %vm67, 1, 0
    %v84 = vsel %vm68, 1, 0
    %v85 = vsel %vm69, 1, 0
    %v86 = vsel %vm70, 1, 0
    %v87 = vsel %vm71, 1, 0
    %v88 = vsel %vm72, 1, 0
    %v89 = vsel %vm73, 1, 0
    %v90 = vsel %vm74, 1, 0
    %v91 = vsel %vm75, 1, 0
    %v92 = vcvt.s32.f32 %v76
    %v93 = vcvt.s32.f32 %v77
    %v94 = vcvt.s32.f32 %v78
    %v95 = vcvt.s32.f32 %v79
    %v96 = vcvt.s32.f32 %v80
    %v97 = vcvt.s32.f32 %v81
    %v98 = vcvt.s32.f32 %v82
    %v99 = vcvt.s32.f32 %v83
    %v100 = vcvt.s32.f32 %v84
    %v101 = vcvt.s32.f32 %v85
    %v102 = vcvt.s32.f32 %v86
    %v103 = vcvt.s32.f32 %v87
    %v104 = vcvt.s32.f32 %v88
    %v105 = vcvt.s32.f32 %v89
    %v106 = vcvt.s32.f32 %v90
    %v107 = vcvt.s32.f32 %v91
    %v108 = vlaneseq
    %v109 = vshrl.u32 %v108, 7
    %v110 = vsub.s32 1, %v109
    %v111 = vrot.slane %v38, %v110
    %vm112 = vcmp.eq.s32.totalorder %v40, %v111
    %vm113 = vcmp.eq.s32.totalorder %v41, %v111
    %vm114 = vcmp.eq.s32.totalorder %v42, %v111
    %vm115 = vcmp.eq.s32.totalorder %v43, %v111
    %vm116 = vcmp.eq.s32.totalorder %v44, %v111
    %vm117 = vcmp.eq.s32.totalorder %v45, %v111
    %vm118 = vcmp.eq.s32.totalorder %v46, %v111
    %vm119 = vcmp.eq.s32.totalorder %v47, %v111
    %vm120 = vcmp.eq.s32.totalorder %v48, %v111
    %vm121 = vcmp.eq.s32.totalorder %v49, %v111
    %vm122 = vcmp.eq.s32.totalorder %v50, %v111
    %vm123 = vcmp.eq.s32.totalorder %v51, %v111
    %vm124 = vcmp.eq.s32.totalorder %v52, %v111
    %vm125 = vcmp.eq.s32.totalorder %v53, %v111
    %vm126 = vcmp.eq.s32.totalorder %v54, %v111
    %vm127 = vcmp.eq.s32.totalorder %v55, %v111
    %v128 = vsel %vm112, 1, 0
    %v129 = vsel %vm113, 1, 0
    %v130 = vsel %vm114, 1, 0
    %v131 = vsel %vm115, 1, 0
    %v132 = vsel %vm116, 1, 0
    %v133 = vsel %vm117, 1, 0
    %v134 = vsel %vm118, 1, 0
    %v135 = vsel %vm119, 1, 0
    %v136 = vsel %vm120, 1, 0
    %v137 = vsel %vm121, 1, 0
    %v138 = vsel %vm122, 1, 0
    %v139 = vsel %vm123, 1, 0
    %v140 = vsel %vm124, 1, 0
    %v141 = vsel %vm125, 1, 0
    %v142 = vsel %vm126, 1, 0
    %v143 = vsel %vm127, 1, 0
    %v144 = vcvt.s32.f32 %v128
    %v145 = vcvt.s32.f32 %v129
    %v146 = vcvt.s32.f32 %v130
    %v147 = vcvt.s32.f32 %v131
    %v148 = vcvt.s32.f32 %v132
    %v149 = vcvt.s32.f32 %v133
    %v150 = vcvt.s32.f32 %v134
    %v151 = vcvt.s32.f32 %v135
    %v152 = vcvt.s32.f32 %v136
    %v153 = vcvt.s32.f32 %v137
    %v154 = vcvt.s32.f32 %v138
    %v155 = vcvt.s32.f32 %v139
    %v156 = vcvt.s32.f32 %v140
    %v157 = vcvt.s32.f32 %v141
    %v158 = vcvt.s32.f32 %v142
    %v159 = vcvt.s32.f32 %v143
    %v160 = vlaneseq
    %v161 = vshrl.u32 %v160, 7
    %v162 = vsub.s32 2, %v161
    %v163 = vrot.slane %v38, %v162
    %vm164 = vcmp.eq.s32.totalorder %v40, %v163
    %vm165 = vcmp.eq.s32.totalorder %v41, %v163
    %vm166 = vcmp.eq.s32.totalorder %v42, %v163
    %vm167 = vcmp.eq.s32.totalorder %v43, %v163
    %vm168 = vcmp.eq.s32.totalorder %v44, %v163
    %vm169 = vcmp.eq.s32.totalorder %v45, %v163
    %vm170 = vcmp.eq.s32.totalorder %v46, %v163
    %vm171 = vcmp.eq.s32.totalorder %v47, %v163
    %vm172 = vcmp.eq.s32.totalorder %v48, %v163
    %vm173 = vcmp.eq.s32.totalorder %v49, %v163
    %vm174 = vcmp.eq.s32.totalorder %v50, %v163
    %vm175 = vcmp.eq.s32.totalorder %v51, %v163
    %vm176 = vcmp.eq.s32.totalorder %v52, %v163
    %vm177 = vcmp.eq.s32.totalorder %v53, %v163
    %vm178 = vcmp.eq.s32.totalorder %v54, %v163
    %vm179 = vcmp.eq.s32.totalorder %v55, %v163
    %v180 = vsel %vm164, 1, 0
    %v181 = vsel %vm165, 1, 0
    %v182 = vsel %vm166, 1, 0
    %v183 = vsel %vm167, 1, 0
    %v184 = vsel %vm168, 1, 0
    %v185 = vsel %vm169, 1, 0
    %v186 = vsel %vm170, 1, 0
    %v187 = vsel %vm171, 1, 0
    %v188 = vsel %vm172, 1, 0
    %v189 = vsel %vm173, 1, 0
    %v190 = vsel %vm174, 1, 0
    %v191 = vsel %vm175, 1, 0
    %v192 = vsel %vm176, 1, 0
    %v193 = vsel %vm177, 1, 0
    %v194 = vsel %vm178, 1, 0
    %v195 = vsel %vm179, 1, 0
    %v196 = vcvt.s32.f32 %v180
    %v197 = vcvt.s32.f32 %v181
    %v198 = vcvt.s32.f32 %v182
    %v199 = vcvt.s32.f32 %v183
    %v200 = vcvt.s32.f32 %v184
    %v201 = vcvt.s32.f32 %v185
    %v202 = vcvt.s32.f32 %v186
    %v203 = vcvt.s32.f32 %v187
    %v204 = vcvt.s32.f32 %v188
    %v205 = vcvt.s32.f32 %v189
    %v206 = vcvt.s32.f32 %v190
    %v207 = vcvt.s32.f32 %v191
    %v208 = vcvt.s32.f32 %v192
    %v209 = vcvt.s32.f32 %v193
    %v210 = vcvt.s32.f32 %v194
    %v211 = vcvt.s32.f32 %v195
    %v212 = vlaneseq
    %v213 = vshrl.u32 %v212, 7
    %v214 = vsub.s32 3, %v213
    %v215 = vrot.slane %v38, %v214
    %vm216 = vcmp.eq.s32.totalorder %v40, %v215
    %vm217 = vcmp.eq.s32.totalorder %v41, %v215
    %vm218 = vcmp.eq.s32.totalorder %v42, %v215
    %vm219 = vcmp.eq.s32.totalorder %v43, %v215
    %vm220 = vcmp.eq.s32.totalorder %v44, %v215
    %vm221 = vcmp.eq.s32.totalorder %v45, %v215
    %vm222 = vcmp.eq.s32.totalorder %v46, %v215
    %vm223 = vcmp.eq.s32.totalorder %v47, %v215
    %vm224 = vcmp.eq.s32.totalorder %v48, %v215
    %vm225 = vcmp.eq.s32.totalorder %v49, %v215
    %vm226 = vcmp.eq.s32.totalorder %v50, %v215
    %vm227 = vcmp.eq.s32.totalorder %v51, %v215
    %vm228 = vcmp.eq.s32.totalorder %v52, %v215
    %vm229 = vcmp.eq.s32.totalorder %v53, %v215
    %vm230 = vcmp.eq.s32.totalorder %v54, %v215
    %vm231 = vcmp.eq.s32.totalorder %v55, %v215
    %v232 = vsel %vm216, 1, 0
    %v233 = vsel %vm217, 1, 0
    %v234 = vsel %vm218, 1, 0
    %v235 = vsel %vm219, 1, 0
    %v236 = vsel %vm220, 1, 0
    %v237 = vsel %vm221, 1, 0
    %v238 = vsel %vm222, 1, 0
    %v239 = vsel %vm223, 1, 0
    %v240 = vsel %vm224, 1, 0
    %v241 = vsel %vm225, 1, 0
    %v242 = vsel %vm226, 1, 0
    %v243 = vsel %vm227, 1, 0
    %v244 = vsel %vm228, 1, 0
    %v245 = vsel %vm229, 1, 0
    %v246 = vsel %vm230, 1, 0
    %v247 = vsel %vm231, 1, 0
    %v248 = vcvt.s32.f32 %v232
    %v249 = vcvt.s32.f32 %v233
    %v250 = vcvt.s32.f32 %v234
    %v251 = vcvt.s32.f32 %v235
    %v252 = vcvt.s32.f32 %v236
    %v253 = vcvt.s32.f32 %v237
    %v254 = vcvt.s32.f32 %v238
    %v255 = vcvt.s32.f32 %v239
    %v256 = vcvt.s32.f32 %v240
    %v257 = vcvt.s32.f32 %v241
    %v258 = vcvt.s32.f32 %v242
    %v259 = vcvt.s32.f32 %v243
    %v260 = vcvt.s32.f32 %v244
    %v261 = vcvt.s32.f32 %v245
    %v262 = vcvt.s32.f32 %v246
    %v263 = vcvt.s32.f32 %v247
    %264 = vxpose.xlu0.b32.start [1/16] %v92, 128
    %265 = vxpose.xlu0.b32.cont [2/16] %v93, 128
    %266 = vxpose.xlu0.b32.cont [3/16] %v94, 128
    %267 = vxpose.xlu0.b32.cont [4/16] %v95, 128
    %268 = vxpose.xlu0.b32.cont [5/16] %v96, 128
    %269 = vxpose.xlu0.b32.cont [6/16] %v97, 128
    %270 = vxpose.xlu0.b32.cont [7/16] %v98, 128
    %271 = vxpose.xlu0.b32.cont [8/16] %v99, 128
    %272 = vxpose.xlu0.b32.cont [9/16] %v100, 128
    %273 = vxpose.xlu0.b32.cont [10/16] %v101, 128
    %274 = vxpose.xlu0.b32.cont [11/16] %v102, 128
    %275 = vxpose.xlu0.b32.cont [12/16] %v103, 128
    %276 = vxpose.xlu0.b32.cont [13/16] %v104, 128
    %277 = vxpose.xlu0.b32.cont [14/16] %v105, 128
    %278 = vxpose.xlu0.b32.cont [15/16] %v106, 128
    %279 = vxpose.xlu0.b32.end [16/16] %v107, 128
    %v280 = vpop.trf.xlu0
    %v281 = vpop.trf.xlu0
    %v282 = vpop.trf.xlu0
    %v283 = vpop.trf.xlu0
    %v284 = vpop.trf.xlu0
    %v285 = vpop.trf.xlu0
    %v286 = vpop.trf.xlu0
    %v287 = vpop.trf.xlu0
    %v288 = vpop.trf.xlu0
    %v289 = vpop.trf.xlu0
    %v290 = vpop.trf.xlu0
    %v291 = vpop.trf.xlu0
    %v292 = vpop.trf.xlu0
    %v293 = vpop.trf.xlu0
    %v294 = vpop.trf.xlu0
    %v295 = vpop.trf.xlu0
    %296 = vxpose.xlu0.b32.start [1/16] %v144, 128
    %297 = vxpose.xlu0.b32.cont [2/16] %v145, 128
    %298 = vxpose.xlu0.b32.cont [3/16] %v146, 128
    %299 = vxpose.xlu0.b32.cont [4/16] %v147, 128
    %300 = vxpose.xlu0.b32.cont [5/16] %v148, 128
    %301 = vxpose.xlu0.b32.cont [6/16] %v149, 128
    %302 = vxpose.xlu0.b32.cont [7/16] %v150, 128
    %303 = vxpose.xlu0.b32.cont [8/16] %v151, 128
    %304 = vxpose.xlu0.b32.cont [9/16] %v152, 128
    %305 = vxpose.xlu0.b32.cont [10/16] %v153, 128
    %306 = vxpose.xlu0.b32.cont [11/16] %v154, 128
    %307 = vxpose.xlu0.b32.cont [12/16] %v155, 128
    %308 = vxpose.xlu0.b32.cont [13/16] %v156, 128
    %309 = vxpose.xlu0.b32.cont [14/16] %v157, 128
    %310 = vxpose.xlu0.b32.cont [15/16] %v158, 128
    %311 = vxpose.xlu0.b32.end [16/16] %v159, 128
    %v312 = vpop.trf.xlu0
    %v313 = vpop.trf.xlu0
    %v314 = vpop.trf.xlu0
    %v315 = vpop.trf.xlu0
    %v316 = vpop.trf.xlu0
    %v317 = vpop.trf.xlu0
    %v318 = vpop.trf.xlu0
    %v319 = vpop.trf.xlu0
    %v320 = vpop.trf.xlu0
    %v321 = vpop.trf.xlu0
    %v322 = vpop.trf.xlu0
    %v323 = vpop.trf.xlu0
    %v324 = vpop.trf.xlu0
    %v325 = vpop.trf.xlu0
    %v326 = vpop.trf.xlu0
    %v327 = vpop.trf.xlu0
    %328 = vxpose.xlu0.b32.start [1/16] %v196, 128
    %329 = vxpose.xlu0.b32.cont [2/16] %v197, 128
    %330 = vxpose.xlu0.b32.cont [3/16] %v198, 128
    %331 = vxpose.xlu0.b32.cont [4/16] %v199, 128
    %332 = vxpose.xlu0.b32.cont [5/16] %v200, 128
    %333 = vxpose.xlu0.b32.cont [6/16] %v201, 128
    %334 = vxpose.xlu0.b32.cont [7/16] %v202, 128
    %335 = vxpose.xlu0.b32.cont [8/16] %v203, 128
    %336 = vxpose.xlu0.b32.cont [9/16] %v204, 128
    %337 = vxpose.xlu0.b32.cont [10/16] %v205, 128
    %338 = vxpose.xlu0.b32.cont [11/16] %v206, 128
    %339 = vxpose.xlu0.b32.cont [12/16] %v207, 128
    %340 = vxpose.xlu0.b32.cont [13/16] %v208, 128
    %341 = vxpose.xlu0.b32.cont [14/16] %v209, 128
    %342 = vxpose.xlu0.b32.cont [15/16] %v210, 128
    %343 = vxpose.xlu0.b32.end [16/16] %v211, 128
    %v344 = vpop.trf.xlu0
    %v345 = vpop.trf.xlu0
    %v346 = vpop.trf.xlu0
    %v347 = vpop.trf.xlu0
    %v348 = vpop.trf.xlu0
    %v349 = vpop.trf.xlu0
    %v350 = vpop.trf.xlu0
    %v351 = vpop.trf.xlu0
    %v352 = vpop.trf.xlu0
    %v353 = vpop.trf.xlu0
    %v354 = vpop.trf.xlu0
    %v355 = vpop.trf.xlu0
    %v356 = vpop.trf.xlu0
    %v357 = vpop.trf.xlu0
    %v358 = vpop.trf.xlu0
    %v359 = vpop.trf.xlu0
    %360 = vxpose.xlu0.b32.start [1/16] %v248, 128
    %361 = vxpose.xlu0.b32.cont [2/16] %v249, 128
    %362 = vxpose.xlu0.b32.cont [3/16] %v250, 128
    %363 = vxpose.xlu0.b32.cont [4/16] %v251, 128
    %364 = vxpose.xlu0.b32.cont [5/16] %v252, 128
    %365 = vxpose.xlu0.b32.cont [6/16] %v253, 128
    %366 = vxpose.xlu0.b32.cont [7/16] %v254, 128
    %367 = vxpose.xlu0.b32.cont [8/16] %v255, 128
    %368 = vxpose.xlu0.b32.cont [9/16] %v256, 128
    %369 = vxpose.xlu0.b32.cont [10/16] %v257, 128
    %370 = vxpose.xlu0.b32.cont [11/16] %v258, 128
    %371 = vxpose.xlu0.b32.cont [12/16] %v259, 128
    %372 = vxpose.xlu0.b32.cont [13/16] %v260, 128
    %373 = vxpose.xlu0.b32.cont [14/16] %v261, 128
    %374 = vxpose.xlu0.b32.cont [15/16] %v262, 128
    %375 = vxpose.xlu0.b32.end [16/16] %v263, 128
    %v376 = vpop.trf.xlu0
    %v377 = vpop.trf.xlu0
    %v378 = vpop.trf.xlu0
    %v379 = vpop.trf.xlu0
    %v380 = vpop.trf.xlu0
    %v381 = vpop.trf.xlu0
    %v382 = vpop.trf.xlu0
    %v383 = vpop.trf.xlu0
    %v384 = vpop.trf.xlu0
    %v385 = vpop.trf.xlu0
    %v386 = vpop.trf.xlu0
    %v387 = vpop.trf.xlu0
    %v388 = vpop.trf.xlu0
    %v389 = vpop.trf.xlu0
    %v390 = vpop.trf.xlu0
    %v391 = vpop.trf.xlu0
    %v392 = vld [vmem:[#allocation5] sm:$0xff]
    %v393 = vld [vmem:[#allocation5 + $0x8] sm:$0xff]
    %v394 = vld [vmem:[#allocation5 + $0x10] sm:$0xff]
    %v395 = vld [vmem:[#allocation5 + $0x18] sm:$0xff]
    %v396 = vld [vmem:[#allocation5 + $0x20] sm:$0xff]
    %v397 = vld [vmem:[#allocation5 + $0x28] sm:$0xff]
    %v398 = vld [vmem:[#allocation5 + $0x30] sm:$0xff]
    %v399 = vld [vmem:[#allocation5 + $0x38] sm:$0xff]
    %v400 = vld [vmem:[#allocation5 + $0x40] sm:$0xff]
    %v401 = vld [vmem:[#allocation5 + $0x48] sm:$0xff]
    %v402 = vld [vmem:[#allocation5 + $0x50] sm:$0xff]
    %v403 = vld [vmem:[#allocation5 + $0x58] sm:$0xff]
    %v404 = vld [vmem:[#allocation5 + $0x60] sm:$0xff]
    %v405 = vld [vmem:[#allocation5 + $0x68] sm:$0xff]
    %v406 = vld [vmem:[#allocation5 + $0x70] sm:$0xff]
    %v407 = vld [vmem:[#allocation5 + $0x78] sm:$0xff]
    %v408 = vld [vmem:[#allocation5 + $0x80] sm:$0xff]
    %v409 = vld [vmem:[#allocation5 + $0x88] sm:$0xff]
    %v410 = vld [vmem:[#allocation5 + $0x90] sm:$0xff]
    %v411 = vld [vmem:[#allocation5 + $0x98] sm:$0xff]
    %v412 = vld [vmem:[#allocation5 + $0xa0] sm:$0xff]
    %v413 = vld [vmem:[#allocation5 + $0xa8] sm:$0xff]
    %v414 = vld [vmem:[#allocation5 + $0xb0] sm:$0xff]
    %v415 = vld [vmem:[#allocation5 + $0xb8] sm:$0xff]
    %v416 = vld [vmem:[#allocation5 + $0xc0] sm:$0xff]
    %v417 = vld [vmem:[#allocation5 + $0xc8] sm:$0xff]
    %v418 = vld [vmem:[#allocation5 + $0xd0] sm:$0xff]
    %v419 = vld [vmem:[#allocation5 + $0xd8] sm:$0xff]
    %v420 = vld [vmem:[#allocation5 + $0xe0] sm:$0xff]
    %v421 = vld [vmem:[#allocation5 + $0xe8] sm:$0xff]
    %v422 = vld [vmem:[#allocation5 + $0xf0] sm:$0xff]
    %v423 = vld [vmem:[#allocation5 + $0xf8] sm:$0xff]
    %v424 = vld [vmem:[#allocation5 + $0x100] sm:$0xff]
    %v425 = vld [vmem:[#allocation5 + $0x108] sm:$0xff]
    %v426 = vld [vmem:[#allocation5 + $0x110] sm:$0xff]
    %v427 = vld [vmem:[#allocation5 + $0x118] sm:$0xff]
    %v428 = vld [vmem:[#allocation5 + $0x120] sm:$0xff]
    %v429 = vld [vmem:[#allocation5 + $0x128] sm:$0xff]
    %v430 = vld [vmem:[#allocation5 + $0x130] sm:$0xff]
    %v431 = vld [vmem:[#allocation5 + $0x138] sm:$0xff]
    %v432 = vld [vmem:[#allocation5 + $0x140] sm:$0xff]
    %v433 = vld [vmem:[#allocation5 + $0x148] sm:$0xff]
    %v434 = vld [vmem:[#allocation5 + $0x150] sm:$0xff]
    %v435 = vld [vmem:[#allocation5 + $0x158] sm:$0xff]
    %v436 = vld [vmem:[#allocation5 + $0x160] sm:$0xff]
    %v437 = vld [vmem:[#allocation5 + $0x168] sm:$0xff]
    %v438 = vld [vmem:[#allocation5 + $0x170] sm:$0xff]
    %v439 = vld [vmem:[#allocation5 + $0x178] sm:$0xff]
    %v440 = vld [vmem:[#allocation5 + $0x180] sm:$0xff]
    %v441 = vld [vmem:[#allocation5 + $0x188] sm:$0xff]
    %v442 = vld [vmem:[#allocation5 + $0x190] sm:$0xff]
    %v443 = vld [vmem:[#allocation5 + $0x198] sm:$0xff]
    %v444 = vld [vmem:[#allocation5 + $0x1a0] sm:$0xff]
    %v445 = vld [vmem:[#allocation5 + $0x1a8] sm:$0xff]
    %v446 = vld [vmem:[#allocation5 + $0x1b0] sm:$0xff]
    %v447 = vld [vmem:[#allocation5 + $0x1b8] sm:$0xff]
    %v448 = vld [vmem:[#allocation5 + $0x1c0] sm:$0xff]
    %v449 = vld [vmem:[#allocation5 + $0x1c8] sm:$0xff]
    %v450 = vld [vmem:[#allocation5 + $0x1d0] sm:$0xff]
    %v451 = vld [vmem:[#allocation5 + $0x1d8] sm:$0xff]
    %v452 = vld [vmem:[#allocation5 + $0x1e0] sm:$0xff]
    %v453 = vld [vmem:[#allocation5 + $0x1e8] sm:$0xff]
    %v454 = vld [vmem:[#allocation5 + $0x1f0] sm:$0xff]
    %v455 = vld [vmem:[#allocation5 + $0x1f8] sm:$0xff]
    %456 = vmatprep.subr.mxu0 0.0
    %457 = vmatpush1.msra.mxu0 %v392
    %458 = vmatprep.subr.mxu0 0.0
    %459 = vmatpush1.msra.mxu0 %v393
    %460 = vmatprep.subr.mxu0 0.0
    %461 = vmatpush1.msra.mxu0 %v394
    %462 = vmatprep.subr.mxu0 0.0
    %463 = vmatpush1.msra.mxu0 %v395
    %464 = vmatprep.subr.mxu0 0.0
    %465 = vmatpush1.msra.mxu0 %v396
    %466 = vmatprep.subr.mxu0 0.0
    %467 = vmatpush1.msra.mxu0 %v397
    %468 = vmatprep.subr.mxu0 0.0
    %469 = vmatpush1.msra.mxu0 %v398
    %470 = vmatprep.subr.mxu0 0.0
    %471 = vmatpush1.msra.mxu0 %v399
    %472 = vmatprep.subr.mxu0 0.0
    %473 = vmatpush1.msra.mxu0 %v400
    %474 = vmatprep.subr.mxu0 0.0
    %475 = vmatpush1.msra.mxu0 %v401
    %476 = vmatprep.subr.mxu0 0.0
    %477 = vmatpush1.msra.mxu0 %v402
    %478 = vmatprep.subr.mxu0 0.0
    %479 = vmatpush1.msra.mxu0 %v403
    %480 = vmatprep.subr.mxu0 0.0
    %481 = vmatpush1.msra.mxu0 %v404
    %482 = vmatprep.subr.mxu0 0.0
    %483 = vmatpush1.msra.mxu0 %v405
    %484 = vmatprep.subr.mxu0 0.0
    %485 = vmatpush1.msra.mxu0 %v406
    %486 = vmatprep.subr.mxu0 0.0
    %487 = vmatpush1.msra.mxu0 %v407
    %488 = vmatprep.subr.mxu0 0.0
    %489 = vmatpush1.msra.mxu0 %v408
    %490 = vmatprep.subr.mxu0 0.0
    %491 = vmatpush1.msra.mxu0 %v409
    %492 = vmatprep.subr.mxu0 0.0
    %493 = vmatpush1.msra.mxu0 %v410
    %494 = vmatprep.subr.mxu0 0.0
    %495 = vmatpush1.msra.mxu0 %v411
    %496 = vmatprep.subr.mxu0 0.0
    %497 = vmatpush1.msra.mxu0 %v412
    %498 = vmatprep.subr.mxu0 0.0
    %499 = vmatpush1.msra.mxu0 %v413
    %500 = vmatprep.subr.mxu0 0.0
    %501 = vmatpush1.msra.mxu0 %v414
    %502 = vmatprep.subr.mxu0 0.0
    %503 = vmatpush1.msra.mxu0 %v415
    %504 = vmatprep.subr.mxu0 0.0
    %505 = vmatpush1.msra.mxu0 %v416
    %506 = vmatprep.subr.mxu0 0.0
    %507 = vmatpush1.msra.mxu0 %v417
    %508 = vmatprep.subr.mxu0 0.0
    %509 = vmatpush1.msra.mxu0 %v418
    %510 = vmatprep.subr.mxu0 0.0
    %511 = vmatpush1.msra.mxu0 %v419
    %512 = vmatprep.subr.mxu0 0.0
    %513 = vmatpush1.msra.mxu0 %v420
    %514 = vmatprep.subr.mxu0 0.0
    %515 = vmatpush1.msra.mxu0 %v421
    %516 = vmatprep.subr.mxu0 0.0
    %517 = vmatpush1.msra.mxu0 %v422
    %518 = vmatprep.subr.mxu0 0.0
    %519 = vmatpush1.msra.mxu0 %v423
    %520 = vmatprep.mubr.f32.mxu0 %v312
    %521 = vmatmul.mubr.f32.gmra.mrb[0].mxu0 %v280
    %v522 = vpop.f32.mrb[0].mxu0
    %v523 = vadd.f32 0.0, %v522
    %v524 = vpop.f32.mrb[0].mxu0
    %525 = vmatprep.mubr.f32.mxu0 %v313
    %526 = vmatmul.mubr.f32.gmra.mrb[0].mxu0 %v281
    %v527 = vpop.f32.mrb[0].mxu0
    %v528 = vadd.f32 0.0, %v527
    %v529 = vpop.f32.mrb[0].mxu0
    %530 = vmatprep.mubr.f32.mxu0 %v314
    %531 = vmatmul.mubr.f32.gmra.mrb[0].mxu0 %v282
    %v532 = vpop.f32.mrb[0].mxu0
    %v533 = vadd.f32 0.0, %v532
    %v534 = vpop.f32.mrb[0].mxu0
    %535 = vmatprep.mubr.f32.mxu0 %v315
    %536 = vmatmul.mubr.f32.gmra.mrb[0].mxu0 %v283
    %v537 = vpop.f32.mrb[0].mxu0
    %v538 = vadd.f32 0.0, %v537
    %v539 = vpop.f32.mrb[0].mxu0
    %540 = vmatprep.mubr.f32.mxu0 %v316
    %541 = vmatmul.mubr.f32.gmra.mrb[0].mxu0 %v284
    %v542 = vpop.f32.mrb[0].mxu0
    %v543 = vadd.f32 0.0, %v542
    %v544 = vpop.f32.mrb[0].mxu0
    %545 = vmatprep.mubr.f32.mxu0 %v317
    %546 = vmatmul.mubr.f32.gmra.mrb[0].mxu0 %v285
    %v547 = vpop.f32.mrb[0].mxu0
    %v548 = vadd.f32 0.0, %v547
    %v549 = vpop.f32.mrb[0].mxu0
    %550 = vmatprep.mubr.f32.mxu0 %v318
    %551 = vmatmul.mubr.f32.gmra.mrb[0].mxu0 %v286
    %v552 = vpop.f32.mrb[0].mxu0
    %v553 = vadd.f32 0.0, %v552
    %v554 = vpop.f32.mrb[0].mxu0
    %555 = vmatprep.mubr.f32.mxu0 %v319
    %556 = vmatmul.mubr.f32.gmra.mrb[0].mxu0 %v287
    %v557 = vpop.f32.mrb[0].mxu0
    %v558 = vadd.f32 0.0, %v557
    %v559 = vpop.f32.mrb[0].mxu0
    %560 = vmatprep.mubr.f32.mxu0 %v320
    %561 = vmatmul.mubr.f32.gmra.mrb[0].mxu0 %v288
    %v562 = vpop.f32.mrb[0].mxu0
    %v563 = vadd.f32 0.0, %v562
    %v564 = vpop.f32.mrb[0].mxu0
    %565 = vmatprep.mubr.f32.mxu0 %v321
    %566 = vmatmul.mubr.f32.gmra.mrb[0].mxu0 %v289
    %v567 = vpop.f32.mrb[0].mxu0
    %v568 = vadd.f32 0.0, %v567
    %v569 = vpop.f32.mrb[0].mxu0
    %570 = vmatprep.mubr.f32.mxu0 %v322
    %571 = vmatmul.mubr.f32.gmra.mrb[0].mxu0 %v290
    %v572 = vpop.f32.mrb[0].mxu0
    %v573 = vadd.f32 0.0, %v572
    %v574 = vpop.f32.mrb[0].mxu0
    %575 = vmatprep.mubr.f32.mxu0 %v323
    %576 = vmatmul.mubr.f32.gmra.mrb[0].mxu0 %v291
    %v577 = vpop.f32.mrb[0].mxu0
    %v578 = vadd.f32 0.0, %v577
    %v579 = vpop.f32.mrb[0].mxu0
    %580 = vmatprep.mubr.f32.mxu0 %v324
    %581 = vmatmul.mubr.f32.gmra.mrb[0].mxu0 %v292
    %v582 = vpop.f32.mrb[0].mxu0
    %v583 = vadd.f32 0.0, %v582
    %v584 = vpop.f32.mrb[0].mxu0
    %585 = vmatprep.mubr.f32.mxu0 %v325
    %586 = vmatmul.mubr.f32.gmra.mrb[0].mxu0 %v293
    %v587 = vpop.f32.mrb[0].mxu0
    %v588 = vadd.f32 0.0, %v587
    %v589 = vpop.f32.mrb[0].mxu0
    %590 = vmatprep.mubr.f32.mxu0 %v326
    %591 = vmatmul.mubr.f32.gmra.mrb[0].mxu0 %v294
    %v592 = vpop.f32.mrb[0].mxu0
    %v593 = vadd.f32 0.0, %v592
    %v594 = vpop.f32.mrb[0].mxu0
    %595 = vmatprep.mubr.f32.mxu0 %v327
    %596 = vmatmul.mubr.f32.gmra.mrb[0].mxu0 %v295
    %v597 = vpop.f32.mrb[0].mxu0
    %v598 = vadd.f32 0.0, %v597
    %v599 = vpop.f32.mrb[0].mxu0
    %600 = vdwg.mxu0
    %601 = vmatprep.subr.mxu0 0.0
    %602 = vmatpush1.msra.mxu0 %v424
    %603 = vmatprep.subr.mxu0 0.0
    %604 = vmatpush1.msra.mxu0 %v425
    %605 = vmatprep.subr.mxu0 0.0
    %606 = vmatpush1.msra.mxu0 %v426
    %607 = vmatprep.subr.mxu0 0.0
    %608 = vmatpush1.msra.mxu0 %v427
    %609 = vmatprep.subr.mxu0 0.0
    %610 = vmatpush1.msra.mxu0 %v428
    %611 = vmatprep.subr.mxu0 0.0
    %612 = vmatpush1.msra.mxu0 %v429
    %613 = vmatprep.subr.mxu0 0.0
    %614 = vmatpush1.msra.mxu0 %v430
    %615 = vmatprep.subr.mxu0 0.0
    %616 = vmatpush1.msra.mxu0 %v431
    %617 = vmatprep.subr.mxu0 0.0
    %618 = vmatpush1.msra.mxu0 %v432
    %619 = vmatprep.subr.mxu0 0.0
    %620 = vmatpush1.msra.mxu0 %v433
    %621 = vmatprep.subr.mxu0 0.0
    %622 = vmatpush1.msra.mxu0 %v434
    %623 = vmatprep.subr.mxu0 0.0
    %624 = vmatpush1.msra.mxu0 %v435
    %625 = vmatprep.subr.mxu0 0.0
    %626 = vmatpush1.msra.mxu0 %v436
    %627 = vmatprep.subr.mxu0 0.0
    %628 = vmatpush1.msra.mxu0 %v437
    %629 = vmatprep.subr.mxu0 0.0
    %630 = vmatpush1.msra.mxu0 %v438
    %631 = vmatprep.subr.mxu0 0.0
    %632 = vmatpush1.msra.mxu0 %v439
    %633 = vmatprep.subr.mxu0 0.0
    %634 = vmatpush1.msra.mxu0 %v440
    %635 = vmatprep.subr.mxu0 0.0
    %636 = vmatpush1.msra.mxu0 %v441
    %637 = vmatprep.subr.mxu0 0.0
    %638 = vmatpush1.msra.mxu0 %v442
    %639 = vmatprep.subr.mxu0 0.0
    %640 = vmatpush1.msra.mxu0 %v443
    %641 = vmatprep.subr.mxu0 0.0
    %642 = vmatpush1.msra.mxu0 %v444
    %643 = vmatprep.subr.mxu0 0.0
    %644 = vmatpush1.msra.mxu0 %v445
    %645 = vmatprep.subr.mxu0 0.0
    %646 = vmatpush1.msra.mxu0 %v446
    %647 = vmatprep.subr.mxu0 0.0
    %648 = vmatpush1.msra.mxu0 %v447
    %649 = vmatprep.subr.mxu0 0.0
    %650 = vmatpush1.msra.mxu0 %v448
    %651 = vmatprep.subr.mxu0 0.0
    %652 = vmatpush1.msra.mxu0 %v449
    %653 = vmatprep.subr.mxu0 0.0
    %654 = vmatpush1.msra.mxu0 %v450
    %655 = vmatprep.subr.mxu0 0.0
    %656 = vmatpush1.msra.mxu0 %v451
    %657 = vmatprep.subr.mxu0 0.0
    %658 = vmatpush1.msra.mxu0 %v452
    %659 = vmatprep.subr.mxu0 0.0
    %660 = vmatpush1.msra.mxu0 %v453
    %661 = vmatprep.subr.mxu0 0.0
    %662 = vmatpush1.msra.mxu0 %v454
    %663 = vmatprep.subr.mxu0 0.0
    %664 = vmatpush1.msra.mxu0 %v455
    %665 = vmatprep.mubr.f32.mxu0 %v376
    %666 = vmatmul.mubr.f32.gmra.mrb[0].mxu0 %v344
    %v667 = vpop.f32.mrb[0].mxu0
    %v668 = vadd.f32 %v523, %v667
    %v669 = vpop.f32.mrb[0].mxu0
    %670 = vmatprep.mubr.f32.mxu0 %v377
    %671 = vmatmul.mubr.f32.gmra.mrb[0].mxu0 %v345
    %v672 = vpop.f32.mrb[0].mxu0
    %v673 = vadd.f32 %v528, %v672
    %v674 = vpop.f32.mrb[0].mxu0
    %675 = vmatprep.mubr.f32.mxu0 %v378
    %676 = vmatmul.mubr.f32.gmra.mrb[0].mxu0 %v346
    %v677 = vpop.f32.mrb[0].mxu0
    %v678 = vadd.f32 %v533, %v677
    %v679 = vpop.f32.mrb[0].mxu0
    %680 = vmatprep.mubr.f32.mxu0 %v379
    %681 = vmatmul.mubr.f32.gmra.mrb[0].mxu0 %v347
    %v682 = vpop.f32.mrb[0].mxu0
    %v683 = vadd.f32 %v538, %v682
    %v684 = vpop.f32.mrb[0].mxu0
    %685 = vmatprep.mubr.f32.mxu0 %v380
    %686 = vmatmul.mubr.f32.gmra.mrb[0].mxu0 %v348
    %v687 = vpop.f32.mrb[0].mxu0
    %v688 = vadd.f32 %v543, %v687
    %v689 = vpop.f32.mrb[0].mxu0
    %690 = vmatprep.mubr.f32.mxu0 %v381
    %691 = vmatmul.mubr.f32.gmra.mrb[0].mxu0 %v349
    %v692 = vpop.f32.mrb[0].mxu0
    %v693 = vadd.f32 %v548, %v692
    %v694 = vpop.f32.mrb[0].mxu0
    %695 = vmatprep.mubr.f32.mxu0 %v382
    %696 = vmatmul.mubr.f32.gmra.mrb[0].mxu0 %v350
    %v697 = vpop.f32.mrb[0].mxu0
    %v698 = vadd.f32 %v553, %v697
    %v699 = vpop.f32.mrb[0].mxu0
    %700 = vmatprep.mubr.f32.mxu0 %v383
    %701 = vmatmul.mubr.f32.gmra.mrb[0].mxu0 %v351
    %v702 = vpop.f32.mrb[0].mxu0
    %v703 = vadd.f32 %v558, %v702
    %v704 = vpop.f32.mrb[0].mxu0
    %705 = vmatprep.mubr.f32.mxu0 %v384
    %706 = vmatmul.mubr.f32.gmra.mrb[0].mxu0 %v352
    %v707 = vpop.f32.mrb[0].mxu0
    %v708 = vadd.f32 %v563, %v707
    %v709 = vpop.f32.mrb[0].mxu0
    %710 = vmatprep.mubr.f32.mxu0 %v385
    %711 = vmatmul.mubr.f32.gmra.mrb[0].mxu0 %v353
    %v712 = vpop.f32.mrb[0].mxu0
    %v713 = vadd.f32 %v568, %v712
    %v714 = vpop.f32.mrb[0].mxu0
    %715 = vmatprep.mubr.f32.mxu0 %v386
    %716 = vmatmul.mubr.f32.gmra.mrb[0].mxu0 %v354
    %v717 = vpop.f32.mrb[0].mxu0
    %v718 = vadd.f32 %v573, %v717
    %v719 = vpop.f32.mrb[0].mxu0
    %720 = vmatprep.mubr.f32.mxu0 %v387
    %721 = vmatmul.mubr.f32.gmra.mrb[0].mxu0 %v355
    %v722 = vpop.f32.mrb[0].mxu0
    %v723 = vadd.f32 %v578, %v722
    %v724 = vpop.f32.mrb[0].mxu0
    %725 = vmatprep.mubr.f32.mxu0 %v388
    %726 = vmatmul.mubr.f32.gmra.mrb[0].mxu0 %v356
    %v727 = vpop.f32.mrb[0].mxu0
    %v728 = vadd.f32 %v583, %v727
    %v729 = vpop.f32.mrb[0].mxu0
    %730 = vmatprep.mubr.f32.mxu0 %v389
    %731 = vmatmul.mubr.f32.gmra.mrb[0].mxu0 %v357
    %v732 = vpop.f32.mrb[0].mxu0
    %v733 = vadd.f32 %v588, %v732
    %v734 = vpop.f32.mrb[0].mxu0
    %735 = vmatprep.mubr.f32.mxu0 %v390
    %736 = vmatmul.mubr.f32.gmra.mrb[0].mxu0 %v358
    %v737 = vpop.f32.mrb[0].mxu0
    %v738 = vadd.f32 %v593, %v737
    %v739 = vpop.f32.mrb[0].mxu0
    %740 = vmatprep.mubr.f32.mxu0 %v391
    %741 = vmatmul.mubr.f32.gmra.mrb[0].mxu0 %v359
    %v742 = vpop.f32.mrb[0].mxu0
    %v743 = vadd.f32 %v598, %v742
    %v744 = vpop.f32.mrb[0].mxu0
    %745 = vdwg.mxu0
    %746 = vst [vmem:[#allocation7] sm:$0xff] %v668
    %747 = vst [vmem:[#allocation7 + $0x8] sm:$0xff] %v673
    %748 = vst [vmem:[#allocation7 + $0x10] sm:$0xff] %v678
    %749 = vst [vmem:[#allocation7 + $0x18] sm:$0xff] %v683
    %750 = vst [vmem:[#allocation7 + $0x20] sm:$0xff] %v688
    %751 = vst [vmem:[#allocation7 + $0x28] sm:$0xff] %v693
    %752 = vst [vmem:[#allocation7 + $0x30] sm:$0xff] %v698
    %753 = vst [vmem:[#allocation7 + $0x38] sm:$0xff] %v703
    %754 = vst [vmem:[#allocation7 + $0x40] sm:$0xff] %v708
    %755 = vst [vmem:[#allocation7 + $0x48] sm:$0xff] %v713
    %756 = vst [vmem:[#allocation7 + $0x50] sm:$0xff] %v718
    %757 = vst [vmem:[#allocation7 + $0x58] sm:$0xff] %v723
    %758 = vst [vmem:[#allocation7 + $0x60] sm:$0xff] %v728
    %759 = vst [vmem:[#allocation7 + $0x68] sm:$0xff] %v733
    %760 = vst [vmem:[#allocation7 + $0x70] sm:$0xff] %v738
    %761 = vst [vmem:[#allocation7 + $0x78] sm:$0xff] %v743
    // Predicated region
    $region18: #{tpu_custom_call.1} parent=1 // pred_check
      _
    $region19: #{tpu_custom_call.1} parent=1 // pred_check_branch
      %763 = sbr.rel (0) target = $region21
    $region20: #{tpu_custom_call.1} parent=1 // pred_region
      %s765 = ssub.s32 2048, 2048
      %766 = vsyncadd [#allocation4], %s765
      %s767 = sshll.u32 [#allocation7], 4
      %s768 = int_to_ptr.vmem [resolvable:$true] %s767
      %773 = dma.vmem_to_hbm [thread:$0]  %s768, 2048, %s2, [#allocation4], 128, 128, 8
    $region21: #{tpu_custom_call.1} parent=1 // pred_fallthru
      _
    // Predicated region
    $region22: #{tpu_custom_call.1} parent=1 // pred_check
      _
    $region23: #{tpu_custom_call.1} parent=1 // pred_check_branch
      %775 = sbr.rel (0) target = $region25
    $region24: #{tpu_custom_call.1} parent=1 // pred_region
      %776 = dma.done [#allocation4], 2048
    $region25: #{tpu_custom_call.1} parent=1 // pred_fallthru
      _
    %777 = vsyncpa [#allocation3], 1
    %778 = vsyncpa [#allocation6], 1
    %779 = vsyncpa [#allocation4], 1

</llo_original>
